<compile_context>
chip_gen: v6e
topology: v6e:2x2x1
jax: 0.10.0
libtpu: 0.0.40
codegen_flags: <defaults>
</compile_context>

<pallas_src>
import math
import functools
import operator
from functools import reduce

import jax
import jax.numpy as jnp
from jax.experimental import pallas as pl
from jax.experimental.pallas import tpu as pltpu


def _prod(xs):
    return reduce(operator.mul, xs, 1)


# ----------------------------- Pallas kernel ------------------------------ #
def _headwise_linear_kernel(x_ref, w_ref, b_ref, o_ref, *, H, I, O):
    # x_ref: (tb, H*I)   w_ref: (H, I, O)   b_ref: (1, H*O)   o_ref: (tb, H*O)
    parts = []
    for h in range(H):  # H is small & static -> unrolled, one MXU dot per head
        x_h = x_ref[:, h * I:(h + 1) * I]                       # (tb, I)
        parts.append(
            jnp.dot(x_h, w_ref[h], preferred_element_type=jnp.float32)
        )                                                        # (tb, O) f32
    y = parts[0] if H == 1 else jnp.concatenate(parts, axis=-1)  # (tb, H*O)
    y = y + b_ref[...]                                           # f32 bias add
    o_ref[...] = y.astype(o_ref.dtype)                           # dense store


def _pick_batch_tile(B, H, I, O, itemsize, budget=8 * 1024 * 1024):
    """Batch tile: bounded double-buffered VMEM footprint, (8,128)-legal."""
    row_bytes = (H * I + H * O) * itemsize           # one batch row of x + y
    tb = max(8, budget // max(1, 2 * row_bytes))     # /2 for double buffering
    tb = min(tb, 512)
    if tb >= B:
        return B                                     # full dim -> always legal
    return max(8, (tb // 8) * 8)                     # multiple of 8 sublanes


def headwise_linear_pallas(x2, w_hio, bias2, *, H, I, O):
    """x2: (B, H*I), w_hio: (H, I, O), bias2: (1, H*O) -> (B, H*O)."""
    B = x2.shape[0]
    dt = x2.dtype
    itemsize = jnp.dtype(dt).itemsize

    tb = _pick_batch_tile(B, H, I, O, itemsize)
    Bp = B
    if tb < B and B % tb != 0:
        Bp = ((B + tb - 1) // tb) * tb
        x2 = jnp.pad(x2, ((0, Bp - B), (0, 0)))
    grid = (Bp // tb,)

    kernel = functools.partial(_headwise_linear_kernel, H=H, I=I, O=O)
    flops = 2 * Bp * H * I * O
    bytes_accessed = (Bp * H * I + H * I * O + H * O + Bp * H * O) * itemsize

    y2 = pl.pallas_call(
        kernel,
        out_shape=jax.ShapeDtypeStruct((Bp, H * O), dt),
        grid_spec=pltpu.PrefetchScalarGridSpec(
            num_scalar_prefetch=0,
            grid=grid,
            in_specs=[
                pl.BlockSpec((tb, H * I), lambda b: (b, 0)),      # batch tile
                pl.BlockSpec((H, I, O), lambda b: (0, 0, 0)),     # resident W
                pl.BlockSpec((1, H * O), lambda b: (0, 0)),       # resident bias
            ],
            out_specs=pl.BlockSpec((tb, H * O), lambda b: (b, 0)),
        ),
        compiler_params=pltpu.CompilerParams(
            dimension_semantics=("parallel",),
            vmem_limit_bytes=32 * 1024 * 1024,
        ),
        cost_estimate=pl.CostEstimate(
            flops=int(flops),
            transcendentals=0,
            bytes_accessed=int(bytes_accessed),
        ),
    )(x2, w_hio, bias2)

    if Bp != B:
        y2 = y2[:B]
    return y2


# ------------------------------ Module wrapper ----------------------------- #
class LinearPallas:
    """JAX/Pallas equivalent of supertransformerlib Linear."""

    def __init__(self, input_shape, output_shape, ensemble_shapes=None, *, key=None):
        if ensemble_shapes is None:
            ensemble_shapes = []
        elif isinstance(ensemble_shapes, int):
            ensemble_shapes = [ensemble_shapes]
        if isinstance(input_shape, int):
            input_shape = [input_shape]
        if isinstance(output_shape, int):
            output_shape = [output_shape]

        self.input_shape = tuple(int(s) for s in input_shape)
        self.output_shape = tuple(int(s) for s in output_shape)
        self.ensemble_shapes = tuple(int(s) for s in ensemble_shapes)

        I = _prod(self.input_shape)
        O = _prod(self.output_shape)
        H = _prod(self.ensemble_shapes)
        kernel_shape = (*self.ensemble_shapes, O, I)
        bias_shape = (*self.ensemble_shapes, O)

        if key is None:
            key = jax.random.PRNGKey(0)
        # kaiming_uniform_(a=sqrt(5)) ~= Uniform(-1/sqrt(fan_in), 1/sqrt(fan_in))
        bound = 1.0 / math.sqrt(I)
        self.kernel = jax.random.uniform(
            key, kernel_shape, dtype=jnp.float32, minval=-bound, maxval=bound
        )
        self.bias = jnp.zeros(bias_shape, dtype=jnp.float32)

        # One-time weight rearrangement -> (H, I, O): removes any in-kernel
        # transpose; the kernel consumes it directly as the MXU RHS.
        self._w_hio = jnp.transpose(self.kernel.reshape(H, O, I), (0, 2, 1))
        self._b_flat = self.bias.reshape(1, H * O)

    def __call__(self, x):
        n_in = len(self.input_shape)
        n_ens = len(self.ensemble_shapes)
        H = _prod(self.ensemble_shapes)
        I = _prod(self.input_shape)
        O = _prod(self.output_shape)

        lead = x.shape[: x.ndim - n_in - n_ens]   # leading batch dims
        B = _prod(lead) if lead else 1

        # [..., *ens, *input] -> (B, H*I): pure reshape, no HBM transpose.
        x2 = x.reshape(B, H * I)
        y2 = headwise_linear_pallas(x2, self._w_hio, self._b_flat, H=H, I=I, O=O)
        # (B, H*O) -> [..., *ens, *output]: pure reshape again.
        return y2.reshape(*lead, *self.ensemble_shapes, *self.output_shape)


# ---------------------------------- main ----------------------------------- #
if __name__ == "__main__":
    key = jax.random.PRNGKey(0)
    k_x, k_w = jax.random.split(key)

    # Module config: input_shape=(4, 8) -> 32, output_shape=(2, 8) -> 16, heads=4
    input_shape = (4, 8)
    output_shape = (2, 8)
    heads = 4
    layer = LinearPallas(input_shape, output_shape, heads, key=k_w)

    # x: [batch=2, seq=8, heads=4, 4, 8]
    x = jax.random.normal(k_x, (2, 8, heads, *input_shape), dtype=jnp.float32)

    y = layer(x)
    y = jax.block_until_ready(y)

    # Pure-JAX reference for sanity
    x_flat = x.reshape(2, 8, heads, _prod(input_shape))
    w = layer.kernel.reshape(heads, _prod(output_shape), _prod(input_shape))
    b = layer.bias.reshape(heads, _prod(output_shape))
    y_ref = jnp.einsum("bshi,hoi->bsho", x_flat, w) + b
    y_ref = y_ref.reshape(2, 8, heads, *output_shape)

    assert y.shape == (2, 8, heads, *output_shape), y.shape
    assert jnp.allclose(y, y_ref, atol=1e-5, rtol=1e-5)

    print("KERNEL_OK")
</pallas_src>

<mosaic_0001>
module attributes {stable_mosaic.version = 11 : i64} {
  func.func @_headwise_linear_kernel(%arg0: i32, %arg1: memref<16x128xf32, #tpu.memory_space<vmem>>, %arg2: memref<4x32x16xf32, #tpu.memory_space<vmem>>, %arg3: memref<1x64xf32, #tpu.memory_space<vmem>>, %arg4: memref<16x64xf32, #tpu.memory_space<vmem>>) attributes {dimension_semantics = [#tpu.dimension_semantics<parallel>], iteration_bounds = array<i64: 1>, scalar_prefetch = 0 : i64, scratch_operands = 0 : i64, tpu.core_type = #tpu.core_type<tc>, window_params = [{transform_indices = @transform_0, window_bounds = array<i64: 16, 128>}, {pipeline_mode = #tpu.pipeline_mode<synchronous>, transform_indices = @transform_1, window_bounds = array<i64: 4, 32, 16>}, {pipeline_mode = #tpu.pipeline_mode<synchronous>, transform_indices = @transform_2, window_bounds = array<i64: 1, 64>}, {transform_indices = @transform_3, window_bounds = array<i64: 16, 64>}]} {
    %c0 = arith.constant 0 : index
    %c0_0 = arith.constant 0 : index
    %0 = vector.load %arg1[%c0, %c0_0] : memref<16x128xf32, #tpu.memory_space<vmem>>, vector<16x32xf32>
    %c0_1 = arith.constant 0 : index
    %c0_2 = arith.constant 0 : index
    %c0_3 = arith.constant 0 : index
    %1 = vector.load %arg2[%c0_1, %c0_2, %c0_3] : memref<4x32x16xf32, #tpu.memory_space<vmem>>, vector<1x32x16xf32>
    %2 = vector.shape_cast %1 : vector<1x32x16xf32> to vector<32x16xf32>
    %cst = arith.constant dense<0.000000e+00> : vector<16x16xf32>
    %3 = tpu.matmul %0, %2, %cst {dimension_numbers = #tpu.dot_dimension_numbers<[1], [0], [0], [1], [0, 0, 1, 1], [], []>} : vector<16x32xf32>, vector<32x16xf32>, vector<16x16xf32> -> vector<16x16xf32>
    %c0_4 = arith.constant 0 : index
    %c32 = arith.constant 32 : index
    %4 = vector.load %arg1[%c0_4, %c32] : memref<16x128xf32, #tpu.memory_space<vmem>>, vector<16x32xf32>
    %c1 = arith.constant 1 : index
    %c0_5 = arith.constant 0 : index
    %c0_6 = arith.constant 0 : index
    %5 = vector.load %arg2[%c1, %c0_5, %c0_6] : memref<4x32x16xf32, #tpu.memory_space<vmem>>, vector<1x32x16xf32>
    %6 = vector.shape_cast %5 : vector<1x32x16xf32> to vector<32x16xf32>
    %cst_7 = arith.constant dense<0.000000e+00> : vector<16x16xf32>
    %7 = tpu.matmul %4, %6, %cst_7 {dimension_numbers = #tpu.dot_dimension_numbers<[1], [0], [0], [1], [0, 0, 1, 1], [], []>} : vector<16x32xf32>, vector<32x16xf32>, vector<16x16xf32> -> vector<16x16xf32>
    %c0_8 = arith.constant 0 : index
    %c64 = arith.constant 64 : index
    %8 = vector.load %arg1[%c0_8, %c64] : memref<16x128xf32, #tpu.memory_space<vmem>>, vector<16x32xf32>
    %c2 = arith.constant 2 : index
    %c0_9 = arith.constant 0 : index
    %c0_10 = arith.constant 0 : index
    %9 = vector.load %arg2[%c2, %c0_9, %c0_10] : memref<4x32x16xf32, #tpu.memory_space<vmem>>, vector<1x32x16xf32>
    %10 = vector.shape_cast %9 : vector<1x32x16xf32> to vector<32x16xf32>
    %cst_11 = arith.constant dense<0.000000e+00> : vector<16x16xf32>
    %11 = tpu.matmul %8, %10, %cst_11 {dimension_numbers = #tpu.dot_dimension_numbers<[1], [0], [0], [1], [0, 0, 1, 1], [], []>} : vector<16x32xf32>, vector<32x16xf32>, vector<16x16xf32> -> vector<16x16xf32>
    %c0_12 = arith.constant 0 : index
    %c96 = arith.constant 96 : index
    %12 = vector.load %arg1[%c0_12, %c96] : memref<16x128xf32, #tpu.memory_space<vmem>>, vector<16x32xf32>
    %c3 = arith.constant 3 : index
    %c0_13 = arith.constant 0 : index
    %c0_14 = arith.constant 0 : index
    %13 = vector.load %arg2[%c3, %c0_13, %c0_14] : memref<4x32x16xf32, #tpu.memory_space<vmem>>, vector<1x32x16xf32>
    %14 = vector.shape_cast %13 : vector<1x32x16xf32> to vector<32x16xf32>
    %cst_15 = arith.constant dense<0.000000e+00> : vector<16x16xf32>
    %15 = tpu.matmul %12, %14, %cst_15 {dimension_numbers = #tpu.dot_dimension_numbers<[1], [0], [0], [1], [0, 0, 1, 1], [], []>} : vector<16x32xf32>, vector<32x16xf32>, vector<16x16xf32> -> vector<16x16xf32>
    %16 = tpu.concatenate %3, %7, %11, %15 in 1 : vector<16x16xf32>, vector<16x16xf32>, vector<16x16xf32>, vector<16x16xf32> -> vector<16x64xf32>
    %c0_16 = arith.constant 0 : index
    %c0_17 = arith.constant 0 : index
    %17 = vector.load %arg3[%c0_16, %c0_17] : memref<1x64xf32, #tpu.memory_space<vmem>>, vector<1x64xf32>
    %18 = vector.broadcast %17 : vector<1x64xf32> to vector<16x64xf32>
    %19 = arith.addf %16, %18 : vector<16x64xf32>
    %c0_18 = arith.constant 0 : index
    %c0_19 = arith.constant 0 : index
    %20 = vector.load %arg4[%c0_18, %c0_19] : memref<16x64xf32, #tpu.memory_space<vmem>>, vector<16x64xf32>
    tpu.vector_store %arg4[%c0_18, %c0_19], %19 {strides = array<i32>} : memref<16x64xf32, #tpu.memory_space<vmem>>, vector<16x64xf32>,
    return
  }
  func.func @transform_0(%arg0: i32) -> (i32, i32) {
    %c0_i32 = arith.constant 0 : i32
    %c0_i32_0 = arith.constant 0 : i32
    return %arg0, %c0_i32 : i32, i32
  }
  func.func @transform_1(%arg0: i32) -> (i32, i32, i32) {
    %c0_i32 = arith.constant 0 : i32
    %c0_i32_0 = arith.constant 0 : i32
    %c0_i32_1 = arith.constant 0 : i32
    %c0_i32_2 = arith.constant 0 : i32
    return %c0_i32, %c0_i32_0, %c0_i32_1 : i32, i32, i32
  }
  func.func @transform_2(%arg0: i32) -> (i32, i32) {
    %c0_i32 = arith.constant 0 : i32
    %c0_i32_0 = arith.constant 0 : i32
    %c0_i32_1 = arith.constant 0 : i32
    return %c0_i32, %c0_i32_0 : i32, i32
  }
  func.func @transform_3(%arg0: i32) -> (i32, i32) {
    %c0_i32 = arith.constant 0 : i32
    %c0_i32_0 = arith.constant 0 : i32
    return %arg0, %c0_i32 : i32, i32
  }
}

</mosaic_0001>

<llo_original>
// kernel: tpu_custom_call.1
$region0: #{tpu_custom_call.1}
  #allocation0 [shape = 'u32[]', space=smem, size = 0x4, offset = 0x4, fixed_abs, tag = 'smem constant byte address 0x4 - core index']
  #allocation1 [shape = 'u32[144,128]{1,0:T(1,128)}', space=vmem, size = 0x12000, scoped, tag = 'internal scratch']
  %s0 = inlined_call_operand.vmem [shape: f32[16,128], index: 0, kind: input, shape index: {}]
  %s1 = inlined_call_operand.vmem [shape: f32[4,32,16], index: 1, kind: input, shape index: {}]
  %s2 = inlined_call_operand.vmem [shape: f32[1,64], index: 2, kind: input, shape index: {}]
  %s3 = inlined_call_operand.hbm [shape: f32[16,64], index: 3, kind: output, shape index: {}]
  %s4 = sld [smem:[#allocation0]]
  $region22: #{tpu_custom_call.1} parent=0
    _
  %s6 = ssub.s32 1, %s4
  %s7 = scalar_select 0, %s6, %s4
  $region1: #{tpu_custom_call.1} parent=0
    #allocation2 [shape = 'u8[8192]{0}', space=vmem, size = 0x2000, scoped, tag = 'output window, operand 0, single buffered']
    #allocation3 [shape = 's32[1]{0}', space=sflag, size = 0x4, scoped, tag = 'scoped memory for tpu_custom_call.1']
    %8 = vsyncpa [#allocation3], 0
    // Predicated region
    $region2: #{tpu_custom_call.1} parent=1 // pred_check
      _
    $region3: #{tpu_custom_call.1} parent=1 // pred_check_branch
      %10 = sbr.rel (0) target = $region5
    $region4: #{tpu_custom_call.1} parent=1 // pred_region
      _
    $region5: #{tpu_custom_call.1} parent=1 // pred_fallthru
      _
    // Predicated region
    $region6: #{tpu_custom_call.1} parent=1 // pred_check
      _
    $region7: #{tpu_custom_call.1} parent=1 // pred_check_branch
      %12 = sbr.rel (0) target = $region9
    $region8: #{tpu_custom_call.1} parent=1 // pred_region
      _
    $region9: #{tpu_custom_call.1} parent=1 // pred_fallthru
      _
    // Predicated region
    $region10: #{tpu_custom_call.1} parent=1 // pred_check
      _
    $region11: #{tpu_custom_call.1} parent=1 // pred_check_branch
      %14 = sbr.rel (0) target = $region13
    $region12: #{tpu_custom_call.1} parent=1 // pred_region
      _
    $region13: #{tpu_custom_call.1} parent=1 // pred_fallthru
      _
    %v15 = vld [vmem:[%s0] sm:$0xff]
    %v16 = vld [vmem:[%s0 + $0x8] sm:$0xff]
    %v17 = vld [vmem:[%s1] sm:$0xff]
    %v18 = vld [vmem:[%s1 + $0x8] sm:$0xff]
    %v19 = vld [vmem:[%s1 + $0x10] sm:$0xff]
    %v20 = vld [vmem:[%s1 + $0x18] sm:$0xff]
    %vm21 = vcmask 261120
    %v23 = vsel %vm21, %v15, 0
    %v26 = vsel %vm21, %v16, 0
    %28 = vmatprep.subr.mxu0 0.0
    %29 = vmatpush1.msra.mxu0 0.0
    %30 = vmatprep.subr.mxu0 0.0
    %31 = vmatpush1.msra.mxu0 0.0
    %32 = vmatprep.subr.mxu0 0.0
    %33 = vmatpush1.msra.mxu0 0.0
    %34 = vmatprep.subr.mxu0 0.0
    %35 = vmatpush1.msra.mxu0 0.0
    %36 = vmatprep.subr.mxu0 0.0
    %37 = vmatpush1.msra.mxu0 0.0
    %38 = vmatprep.subr.mxu0 0.0
    %39 = vmatpush1.msra.mxu0 0.0
    %40 = vmatprep.subr.mxu0 0.0
    %41 = vmatpush1.msra.mxu0 0.0
    %42 = vmatprep.subr.mxu0 0.0
    %43 = vmatpush1.msra.mxu0 0.0
    %44 = vmatprep.subr.mxu0 0.0
    %45 = vmatpush1.msra.mxu0 0.0
    %46 = vmatprep.subr.mxu0 0.0
    %47 = vmatpush1.msra.mxu0 0.0
    %48 = vmatprep.subr.mxu0 0.0
    %49 = vmatpush1.msra.mxu0 0.0
    %50 = vmatprep.subr.mxu0 0.0
    %51 = vmatpush1.msra.mxu0 0.0
    %52 = vmatprep.subr.mxu0 0.0
    %53 = vmatpush1.msra.mxu0 %v20
    %54 = vmatprep.subr.mxu0 0.0
    %55 = vmatpush1.msra.mxu0 %v19
    %56 = vmatprep.subr.mxu0 0.0
    %57 = vmatpush1.msra.mxu0 %v18
    %58 = vmatprep.subr.mxu0 0.0
    %59 = vmatpush1.msra.mxu0 %v17
    %60 = vmatprep.subr.mxu0 0.0
    %61 = vmatpush2.msra.mxu0 0.0
    %62 = vmatprep.subr.mxu0 0.0
    %63 = vmatpush2.msra.mxu0 0.0
    %64 = vmatprep.subr.mxu0 0.0
    %65 = vmatpush2.msra.mxu0 0.0
    %66 = vmatprep.subr.mxu0 0.0
    %67 = vmatpush2.msra.mxu0 0.0
    %68 = vmatprep.subr.mxu0 0.0
    %69 = vmatpush2.msra.mxu0 0.0
    %70 = vmatprep.subr.mxu0 0.0
    %71 = vmatpush2.msra.mxu0 0.0
    %72 = vmatprep.subr.mxu0 0.0
    %73 = vmatpush2.msra.mxu0 0.0
    %74 = vmatprep.subr.mxu0 0.0
    %75 = vmatpush2.msra.mxu0 0.0
    %76 = vmatprep.subr.mxu0 0.0
    %77 = vmatpush2.msra.mxu0 0.0
    %78 = vmatprep.subr.mxu0 0.0
    %79 = vmatpush2.msra.mxu0 0.0
    %80 = vmatprep.subr.mxu0 0.0
    %81 = vmatpush2.msra.mxu0 0.0
    %82 = vmatprep.subr.mxu0 0.0
    %83 = vmatpush2.msra.mxu0 0.0
    %84 = vmatprep.subr.mxu0 0.0
    %85 = vmatpush2.msra.mxu0 0.0
    %86 = vmatprep.subr.mxu0 0.0
    %87 = vmatpush2.msra.mxu0 0.0
    %88 = vmatprep.subr.mxu0 0.0
    %89 = vmatpush2.msra.mxu0 0.0
    %90 = vmatprep.subr.mxu0 0.0
    %91 = vmatpush2.msra.mxu0 0.0
    %92 = vmatprep.mubr.f32.mxu0 0.0
    %93 = vmatmul.mubr.f32.gmra.mxu0 %v23
    %v94 = vpop.f32.mrf.mxu0
    %v95 = vadd.f32 0.0, %v94
    %v96 = vpop.f32.mrf.mxu0
    %97 = vmatprep.mubr.f32.mxu0 0.0
    %98 = vmatmul.mubr.f32.gmra.mxu0 %v26
    %v99 = vpop.f32.mrf.mxu0
    %v100 = vadd.f32 0.0, %v99
    %v101 = vpop.f32.mrf.mxu0
    %102 = vdwg.mxu0
    %s103 = scalar_lea.vmem %s1, 32
    %v104 = vld [vmem:[%s103] sm:$0xff]
    %v105 = vld [vmem:[%s103 + $0x8] sm:$0xff]
    %v106 = vld [vmem:[%s103 + $0x10] sm:$0xff]
    %v107 = vld [vmem:[%s103 + $0x18] sm:$0xff]
    %108 = vrot.lane.b32.xlu0 %v15, 96
    %v109 = vpop.permute.xlu0 %108
    %110 = vrot.lane.b32.xlu0 %v16, 96
    %v111 = vpop.permute.xlu0 %110
    %v112 = vsel %vm21, %v109, 0
    %v114 = vsel %vm21, %v111, 0
    %116 = vmatprep.subr.mxu0 0.0
    %117 = vmatpush1.msra.mxu0 0.0
    %118 = vmatprep.subr.mxu0 0.0
    %119 = vmatpush1.msra.mxu0 0.0
    %120 = vmatprep.subr.mxu0 0.0
    %121 = vmatpush1.msra.mxu0 0.0
    %122 = vmatprep.subr.mxu0 0.0
    %123 = vmatpush1.msra.mxu0 0.0
    %124 = vmatprep.subr.mxu0 0.0
    %125 = vmatpush1.msra.mxu0 0.0
    %126 = vmatprep.subr.mxu0 0.0
    %127 = vmatpush1.msra.mxu0 0.0
    %128 = vmatprep.subr.mxu0 0.0
    %129 = vmatpush1.msra.mxu0 0.0
    %130 = vmatprep.subr.mxu0 0.0
    %131 = vmatpush1.msra.mxu0 0.0
    %132 = vmatprep.subr.mxu0 0.0
    %133 = vmatpush1.msra.mxu0 0.0
    %134 = vmatprep.subr.mxu0 0.0
    %135 = vmatpush1.msra.mxu0 0.0
    %136 = vmatprep.subr.mxu0 0.0
    %137 = vmatpush1.msra.mxu0 0.0
    %138 = vmatprep.subr.mxu0 0.0
    %139 = vmatpush1.msra.mxu0 0.0
    %140 = vmatprep.subr.mxu0 0.0
    %141 = vmatpush1.msra.mxu0 %v107
    %142 = vmatprep.subr.mxu0 0.0
    %143 = vmatpush1.msra.mxu0 %v106
    %144 = vmatprep.subr.mxu0 0.0
    %145 = vmatpush1.msra.mxu0 %v105
    %146 = vmatprep.subr.mxu0 0.0
    %147 = vmatpush1.msra.mxu0 %v104
    %148 = vmatprep.subr.mxu0 0.0
    %149 = vmatpush2.msra.mxu0 0.0
    %150 = vmatprep.subr.mxu0 0.0
    %151 = vmatpush2.msra.mxu0 0.0
    %152 = vmatprep.subr.mxu0 0.0
    %153 = vmatpush2.msra.mxu0 0.0
    %154 = vmatprep.subr.mxu0 0.0
    %155 = vmatpush2.msra.mxu0 0.0
    %156 = vmatprep.subr.mxu0 0.0
    %157 = vmatpush2.msra.mxu0 0.0
    %158 = vmatprep.subr.mxu0 0.0
    %159 = vmatpush2.msra.mxu0 0.0
    %160 = vmatprep.subr.mxu0 0.0
    %161 = vmatpush2.msra.mxu0 0.0
    %162 = vmatprep.subr.mxu0 0.0
    %163 = vmatpush2.msra.mxu0 0.0
    %164 = vmatprep.subr.mxu0 0.0
    %165 = vmatpush2.msra.mxu0 0.0
    %166 = vmatprep.subr.mxu0 0.0
    %167 = vmatpush2.msra.mxu0 0.0
    %168 = vmatprep.subr.mxu0 0.0
    %169 = vmatpush2.msra.mxu0 0.0
    %170 = vmatprep.subr.mxu0 0.0
    %171 = vmatpush2.msra.mxu0 0.0
    %172 = vmatprep.subr.mxu0 0.0
    %173 = vmatpush2.msra.mxu0 0.0
    %174 = vmatprep.subr.mxu0 0.0
    %175 = vmatpush2.msra.mxu0 0.0
    %176 = vmatprep.subr.mxu0 0.0
    %177 = vmatpush2.msra.mxu0 0.0
    %178 = vmatprep.subr.mxu0 0.0
    %179 = vmatpush2.msra.mxu0 0.0
    %180 = vmatprep.mubr.f32.mxu0 0.0
    %181 = vmatmul.mubr.f32.gmra.mxu0 %v112
    %v182 = vpop.f32.mrf.mxu0
    %v183 = vadd.f32 0.0, %v182
    %v184 = vpop.f32.mrf.mxu0
    %185 = vmatprep.mubr.f32.mxu0 0.0
    %186 = vmatmul.mubr.f32.gmra.mxu0 %v114
    %v187 = vpop.f32.mrf.mxu0
    %v188 = vadd.f32 0.0, %v187
    %v189 = vpop.f32.mrf.mxu0
    %190 = vdwg.mxu0
    %s191 = scalar_lea.vmem %s1, 64
    %v192 = vld [vmem:[%s191] sm:$0xff]
    %v193 = vld [vmem:[%s191 + $0x8] sm:$0xff]
    %v194 = vld [vmem:[%s191 + $0x10] sm:$0xff]
    %v195 = vld [vmem:[%s191 + $0x18] sm:$0xff]
    %196 = vrot.lane.b32.xlu0 %v15, 64
    %v197 = vpop.permute.xlu0 %196
    %198 = vrot.lane.b32.xlu0 %v16, 64
    %v199 = vpop.permute.xlu0 %198
    %v200 = vsel %vm21, %v197, 0
    %v202 = vsel %vm21, %v199, 0
    %204 = vmatprep.subr.mxu0 0.0
    %205 = vmatpush1.msra.mxu0 0.0
    %206 = vmatprep.subr.mxu0 0.0
    %207 = vmatpush1.msra.mxu0 0.0
    %208 = vmatprep.subr.mxu0 0.0
    %209 = vmatpush1.msra.mxu0 0.0
    %210 = vmatprep.subr.mxu0 0.0
    %211 = vmatpush1.msra.mxu0 0.0
    %212 = vmatprep.subr.mxu0 0.0
    %213 = vmatpush1.msra.mxu0 0.0
    %214 = vmatprep.subr.mxu0 0.0
    %215 = vmatpush1.msra.mxu0 0.0
    %216 = vmatprep.subr.mxu0 0.0
    %217 = vmatpush1.msra.mxu0 0.0
    %218 = vmatprep.subr.mxu0 0.0
    %219 = vmatpush1.msra.mxu0 0.0
    %220 = vmatprep.subr.mxu0 0.0
    %221 = vmatpush1.msra.mxu0 0.0
    %222 = vmatprep.subr.mxu0 0.0
    %223 = vmatpush1.msra.mxu0 0.0
    %224 = vmatprep.subr.mxu0 0.0
    %225 = vmatpush1.msra.mxu0 0.0
    %226 = vmatprep.subr.mxu0 0.0
    %227 = vmatpush1.msra.mxu0 0.0
    %228 = vmatprep.subr.mxu0 0.0
    %229 = vmatpush1.msra.mxu0 %v195
    %230 = vmatprep.subr.mxu0 0.0
    %231 = vmatpush1.msra.mxu0 %v194
    %232 = vmatprep.subr.mxu0 0.0
    %233 = vmatpush1.msra.mxu0 %v193
    %234 = vmatprep.subr.mxu0 0.0
    %235 = vmatpush1.msra.mxu0 %v192
    %236 = vmatprep.subr.mxu0 0.0
    %237 = vmatpush2.msra.mxu0 0.0
    %238 = vmatprep.subr.mxu0 0.0
    %239 = vmatpush2.msra.mxu0 0.0
    %240 = vmatprep.subr.mxu0 0.0
    %241 = vmatpush2.msra.mxu0 0.0
    %242 = vmatprep.subr.mxu0 0.0
    %243 = vmatpush2.msra.mxu0 0.0
    %244 = vmatprep.subr.mxu0 0.0
    %245 = vmatpush2.msra.mxu0 0.0
    %246 = vmatprep.subr.mxu0 0.0
    %247 = vmatpush2.msra.mxu0 0.0
    %248 = vmatprep.subr.mxu0 0.0
    %249 = vmatpush2.msra.mxu0 0.0
    %250 = vmatprep.subr.mxu0 0.0
    %251 = vmatpush2.msra.mxu0 0.0
    %252 = vmatprep.subr.mxu0 0.0
    %253 = vmatpush2.msra.mxu0 0.0
    %254 = vmatprep.subr.mxu0 0.0
    %255 = vmatpush2.msra.mxu0 0.0
    %256 = vmatprep.subr.mxu0 0.0
    %257 = vmatpush2.msra.mxu0 0.0
    %258 = vmatprep.subr.mxu0 0.0
    %259 = vmatpush2.msra.mxu0 0.0
    %260 = vmatprep.subr.mxu0 0.0
    %261 = vmatpush2.msra.mxu0 0.0
    %262 = vmatprep.subr.mxu0 0.0
    %263 = vmatpush2.msra.mxu0 0.0
    %264 = vmatprep.subr.mxu0 0.0
    %265 = vmatpush2.msra.mxu0 0.0
    %266 = vmatprep.subr.mxu0 0.0
    %267 = vmatpush2.msra.mxu0 0.0
    %268 = vmatprep.mubr.f32.mxu0 0.0
    %269 = vmatmul.mubr.f32.gmra.mxu0 %v200
    %v270 = vpop.f32.mrf.mxu0
    %v271 = vadd.f32 0.0, %v270
    %v272 = vpop.f32.mrf.mxu0
    %273 = vmatprep.mubr.f32.mxu0 0.0
    %274 = vmatmul.mubr.f32.gmra.mxu0 %v202
    %v275 = vpop.f32.mrf.mxu0
    %v276 = vadd.f32 0.0, %v275
    %v277 = vpop.f32.mrf.mxu0
    %278 = vdwg.mxu0
    %s279 = scalar_lea.vmem %s1, 96
    %v280 = vld [vmem:[%s279] sm:$0xff]
    %v281 = vld [vmem:[%s279 + $0x8] sm:$0xff]
    %v282 = vld [vmem:[%s279 + $0x10] sm:$0xff]
    %v283 = vld [vmem:[%s279 + $0x18] sm:$0xff]
    %284 = vrot.lane.b32.xlu0 %v15, 32
    %v285 = vpop.permute.xlu0 %284
    %286 = vrot.lane.b32.xlu0 %v16, 32
    %v287 = vpop.permute.xlu0 %286
    %v288 = vsel %vm21, %v285, 0
    %v290 = vsel %vm21, %v287, 0
    %292 = vmatprep.subr.mxu0 0.0
    %293 = vmatpush1.msra.mxu0 0.0
    %294 = vmatprep.subr.mxu0 0.0
    %295 = vmatpush1.msra.mxu0 0.0
    %296 = vmatprep.subr.mxu0 0.0
    %297 = vmatpush1.msra.mxu0 0.0
    %298 = vmatprep.subr.mxu0 0.0
    %299 = vmatpush1.msra.mxu0 0.0
    %300 = vmatprep.subr.mxu0 0.0
    %301 = vmatpush1.msra.mxu0 0.0
    %302 = vmatprep.subr.mxu0 0.0
    %303 = vmatpush1.msra.mxu0 0.0
    %304 = vmatprep.subr.mxu0 0.0
    %305 = vmatpush1.msra.mxu0 0.0
    %306 = vmatprep.subr.mxu0 0.0
    %307 = vmatpush1.msra.mxu0 0.0
    %308 = vmatprep.subr.mxu0 0.0
    %309 = vmatpush1.msra.mxu0 0.0
    %310 = vmatprep.subr.mxu0 0.0
    %311 = vmatpush1.msra.mxu0 0.0
    %312 = vmatprep.subr.mxu0 0.0
    %313 = vmatpush1.msra.mxu0 0.0
    %314 = vmatprep.subr.mxu0 0.0
    %315 = vmatpush1.msra.mxu0 0.0
    %316 = vmatprep.subr.mxu0 0.0
    %317 = vmatpush1.msra.mxu0 %v283
    %318 = vmatprep.subr.mxu0 0.0
    %319 = vmatpush1.msra.mxu0 %v282
    %320 = vmatprep.subr.mxu0 0.0
    %321 = vmatpush1.msra.mxu0 %v281
    %322 = vmatprep.subr.mxu0 0.0
    %323 = vmatpush1.msra.mxu0 %v280
    %324 = vmatprep.subr.mxu0 0.0
    %325 = vmatpush2.msra.mxu0 0.0
    %326 = vmatprep.subr.mxu0 0.0
    %327 = vmatpush2.msra.mxu0 0.0
    %328 = vmatprep.subr.mxu0 0.0
    %329 = vmatpush2.msra.mxu0 0.0
    %330 = vmatprep.subr.mxu0 0.0
    %331 = vmatpush2.msra.mxu0 0.0
    %332 = vmatprep.subr.mxu0 0.0
    %333 = vmatpush2.msra.mxu0 0.0
    %334 = vmatprep.subr.mxu0 0.0
    %335 = vmatpush2.msra.mxu0 0.0
    %336 = vmatprep.subr.mxu0 0.0
    %337 = vmatpush2.msra.mxu0 0.0
    %338 = vmatprep.subr.mxu0 0.0
    %339 = vmatpush2.msra.mxu0 0.0
    %340 = vmatprep.subr.mxu0 0.0
    %341 = vmatpush2.msra.mxu0 0.0
    %342 = vmatprep.subr.mxu0 0.0
    %343 = vmatpush2.msra.mxu0 0.0
    %344 = vmatprep.subr.mxu0 0.0
    %345 = vmatpush2.msra.mxu0 0.0
    %346 = vmatprep.subr.mxu0 0.0
    %347 = vmatpush2.msra.mxu0 0.0
    %348 = vmatprep.subr.mxu0 0.0
    %349 = vmatpush2.msra.mxu0 0.0
    %350 = vmatprep.subr.mxu0 0.0
    %351 = vmatpush2.msra.mxu0 0.0
    %352 = vmatprep.subr.mxu0 0.0
    %353 = vmatpush2.msra.mxu0 0.0
    %354 = vmatprep.subr.mxu0 0.0
    %355 = vmatpush2.msra.mxu0 0.0
    %356 = vmatprep.mubr.f32.mxu0 0.0
    %357 = vmatmul.mubr.f32.gmra.mxu0 %v288
    %v358 = vpop.f32.mrf.mxu0
    %v359 = vadd.f32 0.0, %v358
    %v360 = vpop.f32.mrf.mxu0
    %361 = vmatprep.mubr.f32.mxu0 0.0
    %362 = vmatmul.mubr.f32.gmra.mxu0 %v290
    %v363 = vpop.f32.mrf.mxu0
    %v364 = vadd.f32 0.0, %v363
    %v365 = vpop.f32.mrf.mxu0
    %366 = vdwg.mxu0
    %369 = vrot.lane.b32.xlu0 %v183, 16
    %v370 = vpop.permute.xlu0 %369
    %371 = vrot.lane.b32.xlu0 %v188, 16
    %v372 = vpop.permute.xlu0 %371
    %377 = vrot.lane.b32.xlu0 %v271, 32
    %v378 = vpop.permute.xlu0 %377
    %379 = vrot.lane.b32.xlu0 %v276, 32
    %v380 = vpop.permute.xlu0 %379
    %385 = vrot.lane.b32.xlu0 %v359, 48
    %v386 = vpop.permute.xlu0 %385
    %387 = vrot.lane.b32.xlu0 %v364, 48
    %v388 = vpop.permute.xlu0 %387
    %vm391 = vcmask 130048
    %v392 = vsel %vm391, %v95, %v370
    %v393 = vsel %vm391, %v100, %v372
    %v394 = vsel %vm21, %v392, %v378
    %v395 = vsel %vm21, %v393, %v380
    %vm396 = vcmask 392192
    %v397 = vsel %vm396, %v394, %v386
    %v398 = vsel %vm396, %v395, %v388
    %v399 = vld [vmem:[%s2] sm:$0x1]
    %v401 = vlaneseq
    %v402 = vshrl.u32 %v401, 7
    %v403 = vsub.s32 0, %v402
    %v404 = vrot.slane %v399, %v403
    %v406 = vadd.f32 %v397, %v404
    %v407 = vadd.f32 %v398, %v404
    %vm408 = vcmask 523264
    %409 = vst.msk [vmem:[#allocation2] sm:$0xff] %vm408, %v406
    %410 = vst.msk [vmem:[#allocation2 + $0x8] sm:$0xff] %vm408, %v407
    // Predicated region
    $region14: #{tpu_custom_call.1} parent=1 // pred_check
      _
    $region15: #{tpu_custom_call.1} parent=1 // pred_check_branch
      %412 = sbr.rel (0) target = $region17
    $region16: #{tpu_custom_call.1} parent=1 // pred_region
      %s414 = ssub.s32 256, 256
      %415 = vsyncadd [#allocation3], %s414
      %s416 = sshll.u32 [#allocation2], 4
      %s417 = int_to_ptr.vmem [resolvable:$true] %s416
      %422 = dma.vmem_to_hbm [thread:$0]  %s417, 256, %s3, [#allocation3], 128, 128, 8
    $region17: #{tpu_custom_call.1} parent=1 // pred_fallthru
      _
    // Predicated region
    $region18: #{tpu_custom_call.1} parent=1 // pred_check
      _
    $region19: #{tpu_custom_call.1} parent=1 // pred_check_branch
      %424 = sbr.rel (0) target = $region21
    $region20: #{tpu_custom_call.1} parent=1 // pred_region
      %425 = dma.done [#allocation3], 256
    $region21: #{tpu_custom_call.1} parent=1 // pred_fallthru
      _
    %426 = vsyncpa [#allocation3], 1

</llo_original>
